<compile_context>
chip_gen: v7x
topology: tpu7x:2x2x1
jax: 0.10.0
libtpu: 0.0.40
codegen_flags: <defaults>
</compile_context>

<pallas_src>
import jax
import jax.numpy as jnp
from jax.experimental import pallas as pl
from jax.experimental.pallas import tpu as pltpu

_VMEM_TILE_BUDGET = 40 * 2 ** 20     # working-set budget for tile selection
_VMEM_LIMIT_CAP = 48 * 2 ** 20       # < 64 MiB physical VMEM on v7x


def _vit_patch_embed_kernel(patches_ref, w_ref, pos_ref, out_ref):
    # patches_ref : (TB, TN, Din) bf16   flattened patches for TB images
    # w_ref       : (Din, H)      bf16   conv weight as a matmul (resident)
    # pos_ref     : (1, TN, H)    f32    pos rows for this n-tile (bias folded)
    # out_ref     : (TB, TN, H)
    tb, tn, din = patches_ref.shape
    h = w_ref.shape[1]
    # Tile-aligned no-op collapse (TN is a multiple of 16): one big MXU pass.
    flat = patches_ref[...].reshape(tb * tn, din)
    emb = jnp.dot(flat, w_ref[...], preferred_element_type=jnp.float32)
    # Broadcast the positional rows over TB; single dense store, full lanes.
    out_ref[...] = (emb.reshape(tb, tn, h) + pos_ref[...]).astype(out_ref.dtype)


def _step_bytes(tb, tn, din, h):
    """Double-buffered VMEM working set for one grid step."""
    return (2 * tb * tn * din * 2        # patches, bf16
            + 2 * tn * h * 4             # pos rows, f32
            + 2 * tb * tn * h * 4        # output tile, f32
            + 2 * din * h * 2)           # resident weight, bf16


def _pick_tiles(B, Np, din, h, budget=_VMEM_TILE_BUDGET):
    """Pick (TB, TN): TN divides Np (multiple of 16), TB divides B (<= 8)."""
    tn_cands = sorted({t for t in range(16, Np + 1, 16) if Np % t == 0} | {Np},
                      reverse=True)
    tn = tn_cands[-1]
    for cand in tn_cands:                     # largest TN that fits with TB=1
        if _step_bytes(1, cand, din, h) <= budget:
            tn = cand
            break
    tb_cands = [t for t in range(1, min(B, 8) + 1)
                if B % t == 0 and _step_bytes(t, tn, din, h) <= budget]
    tb = max(tb_cands) if tb_cands else 1
    # Keep the grid shardable across 2 TensorCores (v7x) when it would
    # otherwise collapse to a single step.
    if Np // tn == 1 and B >= 2 and B // tb < 2:
        shardable = [t for t in tb_cands if B // t >= 2]
        if shardable:
            tb = max(shardable)
    return tb, tn


def vit_embeddings(x, conv_w, conv_b, cls_token, pos_encoding, patch_size,
                   out_dtype=jnp.float32):
    """x: (B, C, H, W) float32, NCHW like PyTorch.  Returns (B, N+1, hidden)."""
    B, C, H, W = x.shape
    P = patch_size
    Hp, Wp = H // P, W // P
    N = Hp * Wp
    hidden = conv_w.shape[0]
    Din = C * P * P

    # --- glue: patch extraction (pure reshape/transpose, no compute) ---
    # (B, C, Hp, P, Wp, P) -> (B, Hp, Wp, C, P, P) -> (B, N, C*P*P)
    # TODO(synk): this transpose + cast is one extra HBM pass over the input;
    # fusing it into the Pallas input DMA (CompilerParams.allow_input_fusion
    # or an NCHW patch-grid index_map) would remove it (biggest win on v5e).
    patches = x.reshape(B, C, Hp, P, Wp, P)
    patches = jnp.transpose(patches, (0, 2, 4, 1, 3, 5)).reshape(B, N, Din)

    # conv weight (hidden, C, P, P) -> matmul weight (Din, hidden), bf16.
    w_mat = conv_w.reshape(hidden, Din).T.astype(jnp.bfloat16)

    pos = pos_encoding.astype(jnp.float32)
    # Fold the conv bias into the per-patch positional rows once (wrapper).
    pos_patch = pos[:, 1:, :] + conv_b[None, None, :]            # (1, N, hidden)
    # cls row handled entirely in the wrapper: cls_token + pos[0].
    cls_row = cls_token.astype(jnp.float32) + pos[:, :1, :]      # (1, 1, hidden)

    # Pad the sequence to a multiple of 16 so in-kernel reshapes stay
    # tile-aligned (bf16 packs 16 sublanes per vreg); padded rows are sliced
    # off after the kernel.
    Np = ((N + 15) // 16) * 16
    if Np != N:
        patches = jnp.pad(patches, ((0, 0), (0, Np - N), (0, 0)))
        pos_patch = jnp.pad(pos_patch, ((0, 0), (0, Np - N), (0, 0)))
    patches = patches.astype(jnp.bfloat16)

    TB, TN = _pick_tiles(B, Np, Din, hidden)
    n_tiles, b_tiles = Np // TN, B // TB
    grid = (n_tiles, b_tiles)          # n outer, b inner -> pos stays resident

    step_bytes = _step_bytes(TB, TN, Din, hidden)
    vmem_limit = int(min(_VMEM_LIMIT_CAP, max(16 * 2 ** 20, 2 * step_bytes)))

    cost = pl.CostEstimate(
        flops=2 * B * Np * Din * hidden,
        transcendentals=0,
        bytes_accessed=(B * Np * Din * 2          # patches, bf16
                        + Din * hidden * 2        # weight, bf16
                        + Np * hidden * 4         # pos (fetched once per tile)
                        + B * Np * hidden * 4),   # output
    )

    patch_out = pl.pallas_call(
        _vit_patch_embed_kernel,
        out_shape=jax.ShapeDtypeStruct((B, Np, hidden), out_dtype),
        grid_spec=pltpu.PrefetchScalarGridSpec(
            num_scalar_prefetch=0,
            grid=grid,
            in_specs=[
                pl.BlockSpec((TB, TN, Din), lambda n, b: (b, n, 0)),     # patches
                pl.BlockSpec((Din, hidden), lambda n, b: (0, 0)),        # weight
                pl.BlockSpec((1, TN, hidden), lambda n, b: (0, n, 0)),   # pos rows
            ],
            out_specs=pl.BlockSpec((TB, TN, hidden), lambda n, b: (b, n, 0)),
        ),
        compiler_params=pltpu.CompilerParams(
            dimension_semantics=("parallel", "parallel"),
            vmem_limit_bytes=vmem_limit,
        ),
        cost_estimate=cost,
    )(patches, w_mat, pos_patch)

    patch_out = patch_out[:, :N, :].astype(jnp.float32)
    # Prepend the (tiny) cls row; cheap XLA concat keeps kernel stores dense.
    cls_rows = jnp.broadcast_to(cls_row, (B, 1, hidden))
    return jnp.concatenate([cls_rows, patch_out], axis=1)


def _reference(x, conv_w, conv_b, cls_token, pos_encoding, patch_size):
    """Pure-JAX (f32) reference reproducing the PyTorch forward exactly."""
    B, C, H, W = x.shape
    P = patch_size
    Hp, Wp = H // P, W // P
    N = Hp * Wp
    hidden = conv_w.shape[0]
    patches = x.reshape(B, C, Hp, P, Wp, P)
    patches = jnp.transpose(patches, (0, 2, 4, 1, 3, 5)).reshape(B, N, C * P * P)
    patch_emb = patches @ conv_w.reshape(hidden, C * P * P).T + conv_b
    cls = jnp.broadcast_to(cls_token, (B, 1, hidden))
    embs = jnp.concatenate([cls, patch_emb], axis=1)
    return embs + pos_encoding


if __name__ == "__main__":
    # Small shapes consistent with the module structure:
    # image_size=16, patch_size=4, num_channels=3, hidden_size=32
    image_size, patch_size, num_channels, hidden_size = 16, 4, 3, 32
    num_patches = (image_size // patch_size) ** 2
    batch = 2

    key = jax.random.PRNGKey(0)
    k_x, k_w, k_b, k_cls, k_pos = jax.random.split(key, 5)

    x = jax.random.normal(k_x, (batch, num_channels, image_size, image_size),
                          dtype=jnp.float32)
    conv_w = jax.random.normal(
        k_w, (hidden_size, num_channels, patch_size, patch_size),
        dtype=jnp.float32) * 0.02
    conv_b = jax.random.normal(k_b, (hidden_size,), dtype=jnp.float32) * 0.02
    cls_token = jax.random.normal(k_cls, (1, 1, hidden_size), dtype=jnp.float32)
    pos_encoding = jax.random.normal(
        k_pos, (1, num_patches + 1, hidden_size), dtype=jnp.float32)

    out = vit_embeddings(x, conv_w, conv_b, cls_token, pos_encoding, patch_size)
    out = jax.block_until_ready(out)

    ref = _reference(x, conv_w, conv_b, cls_token, pos_encoding, patch_size)
    assert out.shape == (batch, num_patches + 1, hidden_size), out.shape
    # bf16 MXU inputs vs f32 reference -> loosen tolerance.
    assert jnp.allclose(out, ref, atol=2e-2, rtol=2e-2), "mismatch vs reference"

    print("KERNEL_OK")
</pallas_src>

<mosaic_0001>
module attributes {stable_mosaic.version = 11 : i64} {
  func.func @_vit_patch_embed_kernel(%arg0: i32, %arg1: i32, %arg2: memref<1x16x48xbf16, #tpu.memory_space<vmem>>, %arg3: memref<48x32xbf16, #tpu.memory_space<vmem>>, %arg4: memref<1x16x32xf32, #tpu.memory_space<vmem>>, %arg5: memref<1x16x32xf32, #tpu.memory_space<vmem>>) attributes {dimension_semantics = [#tpu.dimension_semantics<parallel>, #tpu.dimension_semantics<parallel>], iteration_bounds = array<i64: 1, 2>, scalar_prefetch = 0 : i64, scratch_operands = 0 : i64, tpu.core_type = #tpu.core_type<tc>, window_params = [{transform_indices = @transform_0, window_bounds = array<i64: 1, 16, 48>}, {pipeline_mode = #tpu.pipeline_mode<synchronous>, transform_indices = @transform_1, window_bounds = array<i64: 48, 32>}, {transform_indices = @transform_2, window_bounds = array<i64: 1, 16, 32>}, {transform_indices = @transform_3, window_bounds = array<i64: 1, 16, 32>}]} {
    %c0 = arith.constant 0 : index
    %c0_0 = arith.constant 0 : index
    %c0_1 = arith.constant 0 : index
    %0 = vector.load %arg2[%c0, %c0_0, %c0_1] : memref<1x16x48xbf16, #tpu.memory_space<vmem>>, vector<1x16x48xbf16>
    %1 = vector.shape_cast %0 : vector<1x16x48xbf16> to vector<16x48xbf16>
    %c0_2 = arith.constant 0 : index
    %c0_3 = arith.constant 0 : index
    %2 = vector.load %arg3[%c0_2, %c0_3] : memref<48x32xbf16, #tpu.memory_space<vmem>>, vector<48x32xbf16>
    %cst = arith.constant dense<0.000000e+00> : vector<16x32xf32>
    %3 = tpu.matmul %1, %2, %cst {dimension_numbers = #tpu.dot_dimension_numbers<[1], [0], [0], [1], [0, 0, 1, 1], [], []>} : vector<16x48xbf16>, vector<48x32xbf16>, vector<16x32xf32> -> vector<16x32xf32>
    %4 = vector.shape_cast %3 : vector<16x32xf32> to vector<1x16x32xf32>
    %c0_4 = arith.constant 0 : index
    %c0_5 = arith.constant 0 : index
    %c0_6 = arith.constant 0 : index
    %5 = vector.load %arg4[%c0_4, %c0_5, %c0_6] : memref<1x16x32xf32, #tpu.memory_space<vmem>>, vector<1x16x32xf32>
    %6 = arith.addf %4, %5 : vector<1x16x32xf32>
    %c0_7 = arith.constant 0 : index
    %c0_8 = arith.constant 0 : index
    %c0_9 = arith.constant 0 : index
    %7 = vector.load %arg5[%c0_7, %c0_8, %c0_9] : memref<1x16x32xf32, #tpu.memory_space<vmem>>, vector<1x16x32xf32>
    tpu.vector_store %arg5[%c0_7, %c0_8, %c0_9], %6 {strides = array<i32>} : memref<1x16x32xf32, #tpu.memory_space<vmem>>, vector<1x16x32xf32>,
    return
  }
  func.func @transform_0(%arg0: i32, %arg1: i32) -> (i32, i32, i32) {
    %c0_i32 = arith.constant 0 : i32
    %c0_i32_0 = arith.constant 0 : i32
    return %arg1, %arg0, %c0_i32 : i32, i32, i32
  }
  func.func @transform_1(%arg0: i32, %arg1: i32) -> (i32, i32) {
    %c0_i32 = arith.constant 0 : i32
    %c0_i32_0 = arith.constant 0 : i32
    %c0_i32_1 = arith.constant 0 : i32
    return %c0_i32, %c0_i32_0 : i32, i32
  }
  func.func @transform_2(%arg0: i32, %arg1: i32) -> (i32, i32, i32) {
    %c0_i32 = arith.constant 0 : i32
    %c0_i32_0 = arith.constant 0 : i32
    %c0_i32_1 = arith.constant 0 : i32
    return %c0_i32, %arg0, %c0_i32_0 : i32, i32, i32
  }
  func.func @transform_3(%arg0: i32, %arg1: i32) -> (i32, i32, i32) {
    %c0_i32 = arith.constant 0 : i32
    %c0_i32_0 = arith.constant 0 : i32
    return %arg1, %arg0, %c0_i32 : i32, i32, i32
  }
}

</mosaic_0001>

<llo_original>
// kernel: tpu_custom_call.1
$region0: #{tpu_custom_call.1}
  #allocation0 [shape = 'u32[]', space=smem, size = 0x4, offset = 0x4, fixed_abs, tag = 'smem constant byte address 0x4 - core index']
  #allocation1 [shape = 'u32[144,128]{1,0:T(1,128)}', space=vmem, size = 0x12000, scoped, tag = 'internal scratch']
  %s0 = inlined_call_operand.vmem [shape: bf16[2,16,48], index: 0, kind: input, shape index: {}]
  %s1 = inlined_call_operand.vmem [shape: bf16[48,32], index: 1, kind: input, shape index: {}]
  %s2 = inlined_call_operand.vmem [shape: f32[1,16,32], index: 2, kind: input, shape index: {}]
  %s3 = inlined_call_operand.hbm [shape: f32[2,16,32], index: 3, kind: output, shape index: {}]
  %s4 = sld [smem:[#allocation0]]
  $region45: #{tpu_custom_call.1} parent=0
    _
  %s6 = ssub.s32 1, %s4
  %s7 = scalar_select 0, %s6, %s4
  $region1: #{tpu_custom_call.1} parent=0
    #allocation2 [shape = 'u8[16384]{0}', space=vmem, size = 0x4000, scoped, tag = 'output window, operand 0']
    #allocation3 [shape = 's32[2]{0}', space=sflag, size = 0x8, scoped, tag = 'scoped memory for tpu_custom_call.1']
    %8 = vsyncpa [#allocation3], 0
    %s9 = scalar_lea.sflag [#allocation3], 1
    %10 = vsyncpa %s9, 0
    loop: start=0, step=1, limit=4
    $region2: #{tpu_custom_call.1} parent=1 // loop_pre_header
      _
    $region3: #{tpu_custom_call.1} parent=1 // loop_header
      %s12 = sphi 0, %s16
      %p13 = scmp.ge.s32.totalorder %s12, 4
      %s19 = sphi 0, %s31
      %s20 = sphi 0, %s27
      %s21 = sphi 0, %s19
      %s22 = sphi 0, %s20
      %s23 = sphi 0, %s21
      %s24 = sphi 0, %s22
      %s36 = sphi 0, %s38
      %s39 = sphi 0, %s36
      %s40 = sphi 0, %s39
      %s56 = sphi 0, %s40
      %s60 = sphi 0, %s60
      %s62 = sphi 0, %s60
      %s63 = sphi 0, %s62
      %s77 = sphi 0, %s63
      %s83 = sphi 0, %s85
      %s86 = sphi 0, %s83
      %s87 = sphi 0, %s86
      %s103 = sphi 0, %s87
      %s111 = sphi 0, %s113
      %s114 = sphi 0, %s111
      %s115 = sphi 0, %s114
      %s131 = sphi 0, %s115
    $region4: #{tpu_custom_call.1} parent=1 // loop_header_branch
      %15 = sbr.rel (%p13) target = $region8
    $region5: #{tpu_custom_call.1} parent=1 // loop_body
      %s17 = ssub.s32 %s12, 1
      %s18 = ssub.s32 %s12, 2
      %s25 = sadd.s32 1, %s20
      %p26 = scmp.ge.s32.totalorder %s25, 2
      %s27 = scalar_select %p26, 0, %s25
      %s28 = sadd.s32 1, %s19
      %s29 = scalar_select %p26, %s28, %s19
      %p30 = scmp.ge.s32.totalorder %s29, 1
      %s31 = scalar_select %p30, 0, %s29
      %s32 = ssub.s32 %s20, %s27
      %s33 = ssub.s32 %s19, %s31
      %s34 = sor.u32 %s32, %s33
      %p35 = scmp.eq.s32.totalorder %s34, 0
      %s37 = sadd.s32 %s36, 1
      %s38 = scalar_select %p35, %s36, %s37
      %p41 = pneg %p35
      %p42 = scmp.eq.s32.totalorder %s12, 1
      %p43 = por %p41, %p42
      %p44 = scmp.ne.s32.totalorder %s36, %s39
      %p45 = scmp.eq.s32.totalorder %s12, 0
      %p46 = por %p44, %p45
      %p47 = scmp.ne.s32.totalorder %s36, %s39
      %p48 = scmp.eq.s32.totalorder %s17, 1
      %p49 = por %p47, %p48
      %p50 = scmp.ne.s32.totalorder %s39, %s40
      %p51 = scmp.eq.s32.totalorder %s17, 0
      %p52 = por %p50, %p51
      %p53 = scmp.ne.s32.totalorder %s39, %s40
      %p54 = scmp.eq.s32.totalorder %s18, 1
      %p55 = por %p53, %p54
      %p57 = scmp.ne.s32.totalorder %s40, %s56
      %p58 = scmp.eq.s32.totalorder %s18, 0
      %p59 = por %p57, %p58
      %s61 = sadd.s32 %s60, 1
      %p64 = scmp.eq.s32.totalorder %s12, 1
      %p65 = scmp.ne.s32.totalorder %s60, %s62
      %p66 = scmp.eq.s32.totalorder %s12, 0
      %p67 = por %p65, %p66
      %p68 = scmp.ne.s32.totalorder %s60, %s62
      %p69 = scmp.eq.s32.totalorder %s17, 1
      %p70 = por %p68, %p69
      %p71 = scmp.ne.s32.totalorder %s62, %s63
      %p72 = scmp.eq.s32.totalorder %s17, 0
      %p73 = por %p71, %p72
      %p74 = scmp.ne.s32.totalorder %s62, %s63
      %p75 = scmp.eq.s32.totalorder %s18, 1
      %p76 = por %p74, %p75
      %p78 = scmp.ne.s32.totalorder %s63, %s77
      %p79 = scmp.eq.s32.totalorder %s18, 0
      %p80 = por %p78, %p79
      %s81 = ssub.s32 %s19, %s31
      %p82 = scmp.eq.s32.totalorder %s81, 0
      %s84 = sadd.s32 %s83, 1
      %s85 = scalar_select %p82, %s83, %s84
      %p88 = pneg %p82
      %p89 = scmp.eq.s32.totalorder %s12, 1
      %p90 = por %p88, %p89
      %p91 = scmp.ne.s32.totalorder %s83, %s86
      %p92 = scmp.eq.s32.totalorder %s12, 0
      %p93 = por %p91, %p92
      %p94 = scmp.ne.s32.totalorder %s83, %s86
      %p95 = scmp.eq.s32.totalorder %s17, 1
      %p96 = por %p94, %p95
      %p97 = scmp.ne.s32.totalorder %s86, %s87
      %p98 = scmp.eq.s32.totalorder %s17, 0
      %p99 = por %p97, %p98
      %p100 = scmp.ne.s32.totalorder %s86, %s87
      %p101 = scmp.eq.s32.totalorder %s18, 1
      %p102 = por %p100, %p101
      %p104 = scmp.ne.s32.totalorder %s87, %s103
      %p105 = scmp.eq.s32.totalorder %s18, 0
      %p106 = por %p104, %p105
      %s107 = ssub.s32 %s20, %s27
      %s108 = ssub.s32 %s19, %s31
      %s109 = sor.u32 %s107, %s108
      %p110 = scmp.eq.s32.totalorder %s109, 0
      %s112 = sadd.s32 %s111, 1
      %s113 = scalar_select %p110, %s111, %s112
      %p116 = pneg %p110
      %p117 = scmp.eq.s32.totalorder %s12, 1
      %p118 = por %p116, %p117
      %p119 = scmp.ne.s32.totalorder %s111, %s114
      %p120 = scmp.eq.s32.totalorder %s12, 0
      %p121 = por %p119, %p120
      %p122 = scmp.ne.s32.totalorder %s111, %s114
      %p123 = scmp.eq.s32.totalorder %s17, 1
      %p124 = por %p122, %p123
      %p125 = scmp.ne.s32.totalorder %s114, %s115
      %p126 = scmp.eq.s32.totalorder %s17, 0
      %p127 = por %p125, %p126
      %p128 = scmp.ne.s32.totalorder %s114, %s115
      %p129 = scmp.eq.s32.totalorder %s18, 1
      %p130 = por %p128, %p129
      %p132 = scmp.ne.s32.totalorder %s115, %s131
      %p133 = scmp.eq.s32.totalorder %s18, 0
      %p134 = por %p132, %p133
      %p135 = scmp.le.s32.totalorder 1, %s12
      %p136 = scmp.lt.s32.totalorder %s12, 3
      %p137 = pnand %p135, %p136
      %p138 = pneg %p137
      // Predicated region
      $region9: #{tpu_custom_call.1} parent=5 // pred_check
        _
      $region10: #{tpu_custom_call.1} parent=5 // pred_check_branch
        %140 = sbr.rel (%p137) target = $region12
      $region11: #{tpu_custom_call.1} parent=5 // pred_region
        %s141 = ssub.s32 %s12, 1
        // Predicated region
        $region13: #{tpu_custom_call.1} parent=11 // pred_check
          %p142 = pneg %p73
        $region14: #{tpu_custom_call.1} parent=11 // pred_check_branch
          %144 = sbr.rel (%p142) target = $region16
        $region15: #{tpu_custom_call.1} parent=11 // pred_region
          _
        $region16: #{tpu_custom_call.1} parent=11 // pred_fallthru
          _
        // Predicated region
        $region17: #{tpu_custom_call.1} parent=11 // pred_check
          %p145 = pneg %p99
        $region18: #{tpu_custom_call.1} parent=11 // pred_check_branch
          %147 = sbr.rel (%p145) target = $region20
        $region19: #{tpu_custom_call.1} parent=11 // pred_region
          %s148 = smul.u32 2, %s21
          %p149 = scmp.lt.s32.totalorder %s148, 1
          %s150 = scalar_select %p149, %s148, 1
          %s151 = smul.addr %s150, 8
          %s152 = scalar_lea.vmem %s2, %s151
          %s153 = smul.u32 2, %s21
        $region20: #{tpu_custom_call.1} parent=11 // pred_fallthru
          _
      $region12: #{tpu_custom_call.1} parent=5 // pred_fallthru
        _
      %p154 = scmp.lt.s32.totalorder %s12, 2
      // Predicated region
      $region21: #{tpu_custom_call.1} parent=5 // pred_check
        %p155 = pneg %p154
      $region22: #{tpu_custom_call.1} parent=5 // pred_check_branch
        %157 = sbr.rel (%p155) target = $region24
      $region23: #{tpu_custom_call.1} parent=5 // pred_region
        // Predicated region
        $region25: #{tpu_custom_call.1} parent=23 // pred_check
          %p158 = pneg %p46
        $region26: #{tpu_custom_call.1} parent=23 // pred_check_branch
          %160 = sbr.rel (%p158) target = $region28
        $region27: #{tpu_custom_call.1} parent=23 // pred_region
          %s161 = smul.u32 2, %s19
          %p162 = scmp.lt.s32.totalorder %s20, 1
          %s163 = scalar_select %p162, %s20, 1
          %p164 = scmp.lt.s32.totalorder %s161, 1
          %s165 = scalar_select %p164, %s161, 1
          %s166 = smul.addr %s163, 2
          %s167 = sadd.s32 %s165, %s166
          %s168 = smul.addr %s167, 4
          %s169 = scalar_lea.vmem %s0, %s168
          %s170 = smul.u32 2, %s19
        $region28: #{tpu_custom_call.1} parent=23 // pred_fallthru
          _
      $region24: #{tpu_custom_call.1} parent=5 // pred_fallthru
        _
      %p171 = scmp.le.s32.totalorder 1, %s12
      %p172 = scmp.lt.s32.totalorder %s12, 3
      %p173 = pnand %p171, %p172
      %p174 = pneg %p173
      // Predicated region
      $region29: #{tpu_custom_call.1} parent=5 // pred_check
        _
      $region30: #{tpu_custom_call.1} parent=5 // pred_check_branch
        %176 = sbr.rel (%p173) target = $region32
      $region31: #{tpu_custom_call.1} parent=5 // pred_region
        %s177 = ssub.s32 %s12, 1
        %s178 = smul.u32 2, %s21
        %p179 = scmp.lt.s32.totalorder %s22, 1
        %s180 = scalar_select %p179, %s22, 1
        %p181 = scmp.lt.s32.totalorder %s178, 1
        %s182 = scalar_select %p181, %s178, 1
        %s183 = smul.addr %s180, 2
        %s184 = sadd.s32 %s182, %s183
        %s185 = smul.addr %s184, 4
        %s186 = scalar_lea.vmem %s0, %s185
        %p187 = pneg %p52
        %p188 = pneg %p49
        %p189 = pneg %p73
        %p190 = pneg %p70
        %s191 = smul.u32 2, %s21
        %p192 = scmp.lt.s32.totalorder %s191, 1
        %s193 = scalar_select %p192, %s191, 1
        %s194 = smul.addr %s193, 8
        %s195 = scalar_lea.vmem %s2, %s194
        %p196 = pneg %p99
        %p197 = pneg %p96
        %p198 = pneg %p127
        %p199 = pneg %p124
        %s200 = sand.u32 %s114, 1
        %s201 = scalar_lea.sflag [#allocation3], %s200
        %s202 = sand.u32 %s114, 1
        %s203 = smul.addr %s202, 16
        %s204 = scalar_lea.vmem [#allocation2], %s203
        %s205 = smul.u32 2, %s21
        %p206 = scmp.lt.s32.totalorder %s22, 1
        %s207 = scalar_select %p206, %s22, 1
        %p208 = scmp.lt.s32.totalorder %s205, 1
        %s209 = scalar_select %p208, %s205, 1
        %s210 = smul.addr %s207, 2
        %s211 = sadd.s32 %s209, %s210
        %s212 = smul.addr %s211, 4
        %s213 = scalar_lea.vmem %s0, %s212
        %s214 = smul.u32 2, %s21
        %s215 = smul.u32 2, %s21
        %p216 = scmp.lt.s32.totalorder %s215, 1
        %s217 = scalar_select %p216, %s215, 1
        %s218 = smul.addr %s217, 8
        %s219 = scalar_lea.vmem %s2, %s218
        %s220 = smul.u32 2, %s21
        %s221 = smul.u32 2, %s21
        %v223 = vld [vmem:[%s213] sm:$0xf]
        %v224 = vld [vmem:[%s213 + $0x4] sm:$0xf]
        %v225 = vld [vmem:[%s1] sm:$0xf]
        %v226 = vld [vmem:[%s1 + $0x4] sm:$0xf]
        %v227 = vld [vmem:[%s1 + $0x8] sm:$0xf]
        %v228 = vld [vmem:[%s1 + $0xc] sm:$0xf]
        %v229 = vld [vmem:[%s1 + $0x10] sm:$0xf]
        %v230 = vld [vmem:[%s1 + $0x14] sm:$0xf]
        %v233 = vunpack.c.l.b16 %v223
        %v234 = vunpack.c.l.b16 %v224
        %v235 = vpack.c.b16 %v234, %v233
        %v242 = vunpack.c.l.b16 %v225
        %v243 = vunpack.c.l.b16 %v226
        %v244 = vunpack.c.l.b16 %v227
        %v245 = vunpack.c.l.b16 %v228
        %v246 = vunpack.c.l.b16 %v229
        %v247 = vunpack.c.l.b16 %v230
        %v248 = vpack.c.b16 %v243, %v242
        %v249 = vpack.c.b16 %v245, %v244
        %v250 = vpack.c.b16 %v247, %v246
        %vm254 = vcmask 392192
        %v256 = vsel %vm254, %v235, 0
        %258 = vmatprep.subr.bf16.mxu0 0
        %259 = vmatpush1.bf16.msra.mxu0 %v248
        %260 = vmatprep.subr.bf16.mxu0 0
        %261 = vmatpush1.bf16.msra.mxu0 %v249
        %262 = vmatprep.subr.bf16.mxu0 0
        %263 = vmatpush1.bf16.msra.mxu0 %v250
        %264 = vmatprep.subr.bf16.mxu0 0
        %265 = vmatpush1.bf16.msra.mxu0 0
        %266 = vmatprep.subr.bf16.mxu0 0
        %267 = vmatpush1.bf16.msra.mxu0 0
        %268 = vmatprep.subr.bf16.mxu0 0
        %269 = vmatpush1.bf16.msra.mxu0 0
        %270 = vmatprep.subr.bf16.mxu0 0
        %271 = vmatpush1.bf16.msra.mxu0 0
        %272 = vmatprep.subr.bf16.mxu0 0
        %273 = vmatpush1.bf16.msra.mxu0 0
        %274 = vmatprep.subr.bf16.mxu0 0
        %275 = vmatpush1.bf16.msra.mxu0 0
        %276 = vmatprep.subr.bf16.mxu0 0
        %277 = vmatpush1.bf16.msra.mxu0 0
        %278 = vmatprep.subr.bf16.mxu0 0
        %279 = vmatpush1.bf16.msra.mxu0 0
        %280 = vmatprep.subr.bf16.mxu0 0
        %281 = vmatpush1.bf16.msra.mxu0 0
        %282 = vmatprep.subr.bf16.mxu0 0
        %283 = vmatpush1.bf16.msra.mxu0 0
        %284 = vmatprep.subr.bf16.mxu0 0
        %285 = vmatpush1.bf16.msra.mxu0 0
        %286 = vmatprep.subr.bf16.mxu0 0
        %287 = vmatpush1.bf16.msra.mxu0 0
        %288 = vmatprep.subr.bf16.mxu0 0
        %289 = vmatpush1.bf16.msra.mxu0 0
        %290 = vmatprep.mubr.bf16.mxu0 0
        %291 = vmatmul.mubr.bf16.gmra.mrb[0].mxu0 %v256
        %v292 = vpop.f32.mrb[0].mxu0
        %v293 = vadd.f32 0.0, %v292
        %v294 = vpop.f32.mrb[0].mxu0
        %v295 = vpop.f32.mrb[0].mxu0
        %v296 = vadd.f32 0.0, %v295
        %v297 = vpop.f32.mrb[0].mxu0
        %298 = vdwg.mxu0
        %v299 = vld [vmem:[%s219] sm:$0xff]
        %v300 = vld [vmem:[%s219 + $0x8] sm:$0xff]
        %v301 = vadd.f32 %v293, %v299
        %v302 = vadd.f32 %v296, %v300
        %vm303 = vcmask 261120
        %304 = vst.msk [vmem:[%s204] sm:$0xff] %vm303, %v301
        %305 = vst.msk [vmem:[%s204 + $0x8] sm:$0xff] %vm303, %v302
        %s306 = sand.u32 %s114, 1
        %s307 = scalar_lea.sflag [#allocation3], %s306
        %s308 = sand.u32 %s114, 1
        %s309 = smul.addr %s308, 16
        %s310 = scalar_lea.vmem [#allocation2], %s309
        // Predicated region
        $region33: #{tpu_custom_call.1} parent=31 // pred_check
          %p311 = pneg %p124
        $region34: #{tpu_custom_call.1} parent=31 // pred_check_branch
          %313 = sbr.rel (%p311) target = $region36
        $region35: #{tpu_custom_call.1} parent=31 // pred_region
          %s314 = smul.u32 2, %s21
          %s316 = ssub.s32 256, 256
          %317 = vsyncadd %s307, %s316
          %s318 = smul.addr %s22, 2
          %s319 = sadd.s32 %s314, %s318
          %s320 = smul.addr %s319, 128
          %s321 = scalar_lea.hbm %s3, %s320
          %s322 = sshll.u32 %s310, 4
          %s323 = int_to_ptr.vmem [resolvable:$true] %s322
          %328 = dma.vmem_to_hbm [thread:$0]  %s323, 256, %s321, %s307, 128, 128, 8
        $region36: #{tpu_custom_call.1} parent=31 // pred_fallthru
          _
      $region32: #{tpu_custom_call.1} parent=5 // pred_fallthru
        _
      %p329 = scmp.le.s32.totalorder 2, %s12
      // Predicated region
      $region37: #{tpu_custom_call.1} parent=5 // pred_check
        %p330 = pneg %p329
      $region38: #{tpu_custom_call.1} parent=5 // pred_check_branch
        %332 = sbr.rel (%p330) target = $region40
      $region39: #{tpu_custom_call.1} parent=5 // pred_region
        %s333 = ssub.s32 %s12, 2
        // Predicated region
        $region41: #{tpu_custom_call.1} parent=39 // pred_check
          %p334 = pneg %p130
        $region42: #{tpu_custom_call.1} parent=39 // pred_check_branch
          %336 = sbr.rel (%p334) target = $region44
        $region43: #{tpu_custom_call.1} parent=39 // pred_region
          %s337 = sand.u32 %s115, 1
          %s338 = scalar_lea.sflag [#allocation3], %s337
          %s339 = sand.u32 %s115, 1
          %s340 = smul.addr %s339, 16
          %s341 = scalar_lea.vmem [#allocation2], %s340
          %342 = dma.done %s338, 256
        $region44: #{tpu_custom_call.1} parent=39 // pred_fallthru
          _
      $region40: #{tpu_custom_call.1} parent=5 // pred_fallthru
        _
    $region6: #{tpu_custom_call.1} parent=1 // loop_footer
      %s16 = sadd.s32 1, %s12
    $region7: #{tpu_custom_call.1} parent=1 // loop_footer_branch
      %11 = sbr.rel target = $region3
    $region8: #{tpu_custom_call.1} parent=1 // loop_exit
      _
    %343 = vsyncpa [#allocation3], 1
    %s344 = scalar_lea.sflag [#allocation3], 1
    %345 = vsyncpa %s344, 1

</llo_original>
